<compile_context>
chip_gen: v5e
topology: v5e:2x2
jax: 0.10.0
libtpu: 0.0.40
codegen_flags: <defaults>
</compile_context>

<pallas_src>
import functools

import jax
import jax.numpy as jnp
from jax import lax
from jax.experimental import pallas as pl
from jax.experimental.pallas import tpu as pltpu

LANES = 128
SUBLANES = 8
TILE_ROWS = 8192       # rows per grid step: 8192*128*4B = 4 MiB per f32 input tile
CHUNK_ROWS = 512       # in-kernel fold granularity -> ~256 KiB f32 temporaries
NUM_CORES = 2          # leading "parallel" grid axis (v7x megacore); harmless on 1-TC chips
VMEM_LIMIT = 48 << 20  # 24 MiB double-buffered input tiles + temps, < v7x 64 MiB/TC


def _weighted_l1_kernel(pred_ref, target_ref, weight_ref, out_ref, *,
                        steps_per_core, tile_rows, chunk_rows, num_chunks,
                        valid_rows, mask_tail):
    c = pl.program_id(0)   # core split ("parallel")
    i = pl.program_id(1)   # streaming reduction axis ("arbitrary")

    # The (1, 8, 128) output block is resident across the reduction axis and
    # doubles as the f32 partial-sum accumulator for this core.
    @pl.when(i == 0)
    def _():
        out_ref[...] = jnp.zeros_like(out_ref)

    # Logical (un-clamped) first row of this block; any row >= valid_rows
    # (ragged tile tail, or a fully out-of-range block from the core split)
    # is masked to zero before it reaches the accumulator.
    start_row = (c * steps_per_core + i) * tile_rows

    if mask_tail:
        # Grid-invariant local row ids, hoisted out of the chunk loop; only a
        # scalar threshold changes per chunk.
        local_row = lax.broadcasted_iota(jnp.int32, (chunk_rows, LANES), 0)

    def fold_chunk(k, carry):
        r0 = pl.multiple_of(k * chunk_rows, chunk_rows)
        p = pred_ref[pl.ds(r0, chunk_rows), :].astype(jnp.float32)
        t = target_ref[pl.ds(r0, chunk_rows), :].astype(jnp.float32)
        w = weight_ref[pl.ds(r0, chunk_rows), :].astype(jnp.float32)
        contrib = w * jnp.abs(p - t)                       # (chunk_rows, 128) f32
        if mask_tail:
            thresh = valid_rows - start_row - k * chunk_rows
            contrib = jnp.where(local_row < thresh, contrib, jnp.float32(0.0))
        # Fold (chunk_rows, 128) -> (8, 128) with pure vreg adds (VPU only);
        # the single cross-lane/sublane reduce happens in the wrapper.
        out_ref[0, :, :] += contrib.reshape(
            chunk_rows // SUBLANES, SUBLANES, LANES).sum(axis=0)
        return carry

    lax.fori_loop(0, num_chunks, fold_chunk, 0)


def weighted_l1_loss(pred, target, weight):
    assert pred.shape == target.shape == weight.shape
    n = pred.size

    pred_f = jnp.ravel(pred)      # contiguous ravel: layout bitcast, no HBM copy
    target_f = jnp.ravel(target)
    weight_f = jnp.ravel(weight)

    def _jnp_sum(p, t, w):
        return jnp.sum(w.astype(jnp.float32) *
                       jnp.abs(p.astype(jnp.float32) - t.astype(jnp.float32)))

    # Sub-32-bit dtypes pack multiple rows per sublane -> block row alignment.
    packing = max(max(1, 4 // jnp.dtype(a.dtype).itemsize)
                  for a in (pred, target, weight))
    row_align = SUBLANES * packing

    m = (n // LANES) * LANES            # lane-aligned prefix handled by the kernel
    rows = m // LANES

    if rows < row_align:
        # Tiny input: not worth a kernel launch (and no aligned tile exists).
        return _jnp_sum(pred_f, target_f, weight_f) / jnp.float32(n)

    # <128-element ragged tail handled with plain jnp (replaces the old jnp.pad
    # full-array copies of all three inputs).
    # TODO(synk): a flat 1-D BlockSpec with element-granular masking would also
    # avoid the prefix-slice copy XLA may emit when n % 128 != 0.
    if m < n:
        tail = _jnp_sum(pred_f[m:], target_f[m:], weight_f[m:])
        pred_f, target_f, weight_f = pred_f[:m], target_f[:m], weight_f[:m]
    else:
        tail = jnp.float32(0.0)

    pred2 = pred_f.reshape(rows, LANES)
    target2 = target_f.reshape(rows, LANES)
    weight2 = weight_f.reshape(rows, LANES)

    # Largest aligned row tile that fits the array (rows >= row_align here).
    tile_rows = min(TILE_ROWS, (rows // row_align) * row_align)
    num_row_blocks = pl.cdiv(rows, tile_rows)
    num_cores = NUM_CORES if num_row_blocks >= 2 else 1
    steps_per_core = pl.cdiv(num_row_blocks, num_cores)
    # Mask needed iff the blocks we iterate over cover more rows than exist.
    mask_tail = (num_cores * steps_per_core * tile_rows) != rows

    chunk_rows = CHUNK_ROWS if tile_rows % CHUNK_ROWS == 0 else tile_rows
    num_chunks = tile_rows // chunk_rows

    def in_map(c, i):
        # Clamp so blocks past the end (odd block count split over 2 cores)
        # never address out-of-range data; their rows are masked in-kernel.
        return (jnp.minimum(c * steps_per_core + i, num_row_blocks - 1), 0)

    tile_spec = pl.BlockSpec((tile_rows, LANES), in_map)

    kernel = functools.partial(
        _weighted_l1_kernel,
        steps_per_core=steps_per_core, tile_rows=tile_rows,
        chunk_rows=chunk_rows, num_chunks=num_chunks,
        valid_rows=rows, mask_tail=mask_tail)

    in_bytes = sum(jnp.dtype(a.dtype).itemsize for a in (pred, target, weight)) * m
    cost = pl.CostEstimate(flops=3 * m, transcendentals=0,
                           bytes_accessed=in_bytes + num_cores * SUBLANES * LANES * 4)

    partials = pl.pallas_call(
        kernel,
        out_shape=jax.ShapeDtypeStruct((num_cores, SUBLANES, LANES), jnp.float32),
        grid_spec=pltpu.PrefetchScalarGridSpec(
            num_scalar_prefetch=0,
            grid=(num_cores, steps_per_core),
            in_specs=[tile_spec, tile_spec, tile_spec],
            out_specs=pl.BlockSpec((1, SUBLANES, LANES), lambda c, i: (c, 0, 0)),
        ),
        compiler_params=pltpu.CompilerParams(
            dimension_semantics=("parallel", "arbitrary"),
            vmem_limit_bytes=VMEM_LIMIT),
        cost_estimate=cost,
    )(pred2, target2, weight2)

    return (jnp.sum(partials) + tail) / jnp.float32(n)


if __name__ == "__main__":
    key = jax.random.PRNGKey(0)

    def run_case(k, shape, dtype=jnp.float32):
        k1, k2, k3 = jax.random.split(k, 3)
        pred = jax.random.normal(k1, shape, dtype=jnp.float32).astype(dtype)
        target = jax.random.normal(k2, shape, dtype=jnp.float32).astype(dtype)
        weight = jax.random.uniform(k3, shape, dtype=jnp.float32).astype(dtype)
        loss = weighted_l1_loss(pred, target, weight)
        jax.block_until_ready(loss)
        ref = jnp.mean(weight.astype(jnp.float32) *
                       jnp.abs(pred.astype(jnp.float32) - target.astype(jnp.float32)))
        tol = 1e-5 if dtype == jnp.float32 else 2e-3
        assert jnp.allclose(loss, ref, rtol=tol, atol=tol), (shape, dtype, loss, ref)

    keys = jax.random.split(key, 5)
    run_case(keys[0], (2, 4, 16, 16))           # 2048 elems: lane-aligned, single-tile kernel path
    run_case(keys[1], (2, 3, 10, 10))           # 600 elems: tiny-input jnp fallback
    run_case(keys[2], (10, 2, 128))             # 2560 elems -> 20 rows: 2-core split + row-tail mask
    run_case(keys[3], (5, 7, 37))               # 1295 elems: kernel prefix + <128-elem jnp tail
    run_case(keys[4], (16, 256), jnp.bfloat16)  # bf16 passthrough (16-row sublane packing)

    print("KERNEL_OK")
</pallas_src>

<mosaic_0001>
module attributes {stable_mosaic.version = 11 : i64} {
  func.func @_weighted_l1_kernel(%arg0: i32, %arg1: i32, %arg2: memref<16x128xf32, #tpu.memory_space<vmem>>, %arg3: memref<16x128xf32, #tpu.memory_space<vmem>>, %arg4: memref<16x128xf32, #tpu.memory_space<vmem>>, %arg5: memref<1x8x128xf32, #tpu.memory_space<vmem>>) attributes {dimension_semantics = [#tpu.dimension_semantics<parallel>, #tpu.dimension_semantics<arbitrary>], iteration_bounds = array<i64: 1, 1>, scalar_prefetch = 0 : i64, scratch_operands = 0 : i64, tpu.core_type = #tpu.core_type<tc>, window_params = [{transform_indices = @transform_0, window_bounds = array<i64: 16, 128>}, {transform_indices = @transform_1, window_bounds = array<i64: 16, 128>}, {transform_indices = @transform_2, window_bounds = array<i64: 16, 128>}, {transform_indices = @transform_3, window_bounds = array<i64: 1, 8, 128>}]} {
    %c0_i32 = arith.constant 0 : i32
    %0 = arith.cmpi eq, %arg1, %c0_i32 : i32
    %1 = arith.extui %0 : i1 to i32
    %c0_i32_0 = arith.constant 0 : i32
    %2 = arith.cmpi ne, %1, %c0_i32_0 : i32
    scf.if %2 {
      %cst_10 = arith.constant 0.000000e+00 : f32
      %22 = vector.broadcast %cst_10 : f32 to vector<1x8x128xf32>
      %c0_11 = arith.constant 0 : index
      %c0_12 = arith.constant 0 : index
      %c0_13 = arith.constant 0 : index
      %23 = vector.load %arg5[%c0_11, %c0_12, %c0_13] : memref<1x8x128xf32, #tpu.memory_space<vmem>>, vector<1x8x128xf32>
      tpu.vector_store %arg5[%c0_11, %c0_12, %c0_13], %22 {strides = array<i32>} : memref<1x8x128xf32, #tpu.memory_space<vmem>>, vector<1x8x128xf32>,
    } else {
    }
    %c0_i32_1 = arith.constant 0 : i32
    %c16_i32 = arith.constant 16 : i32
    %3 = arith.muli %c0_i32_1, %c16_i32 : i32
    %4 = tpu.assume_multiple %3, 16 : i32
    %5 = arith.index_cast %4 : i32 to index
    %c0 = arith.constant 0 : index
    %6 = vector.load %arg2[%5, %c0] : memref<16x128xf32, #tpu.memory_space<vmem>>, vector<16x128xf32>
    %7 = arith.index_cast %4 : i32 to index
    %c0_2 = arith.constant 0 : index
    %8 = vector.load %arg3[%7, %c0_2] : memref<16x128xf32, #tpu.memory_space<vmem>>, vector<16x128xf32>
    %9 = arith.index_cast %4 : i32 to index
    %c0_3 = arith.constant 0 : index
    %10 = vector.load %arg4[%9, %c0_3] : memref<16x128xf32, #tpu.memory_space<vmem>>, vector<16x128xf32>
    %11 = arith.subf %6, %8 : vector<16x128xf32>
    %12 = math.absf %11 : vector<16x128xf32>
    %13 = arith.mulf %10, %12 : vector<16x128xf32>
    %c0_4 = arith.constant 0 : index
    %c0_5 = arith.constant 0 : index
    %c0_6 = arith.constant 0 : index
    %14 = vector.load %arg5[%c0_4, %c0_5, %c0_6] : memref<1x8x128xf32, #tpu.memory_space<vmem>>, vector<1x8x128xf32>
    %15 = vector.shape_cast %14 : vector<1x8x128xf32> to vector<8x128xf32>
    %16 = vector.shape_cast %13 : vector<16x128xf32> to vector<2x8x128xf32>
    %cst = arith.constant dense<0.000000e+00> : vector<8x128xf32>
    %17 = vector.multi_reduction <add>, %16, %cst [0] : vector<2x8x128xf32> to vector<8x128xf32>
    %18 = arith.addf %15, %17 : vector<8x128xf32>
    %c0_7 = arith.constant 0 : index
    %c0_8 = arith.constant 0 : index
    %c0_9 = arith.constant 0 : index
    %19 = vector.load %arg5[%c0_7, %c0_8, %c0_9] : memref<1x8x128xf32, #tpu.memory_space<vmem>>, vector<1x8x128xf32>
    %20 = vector.shape_cast %19 : vector<1x8x128xf32> to vector<8x128xf32>
    %21 = vector.shape_cast %18 : vector<8x128xf32> to vector<1x8x128xf32>
    tpu.vector_store %arg5[%c0_7, %c0_8, %c0_9], %21 {strides = array<i32>} : memref<1x8x128xf32, #tpu.memory_space<vmem>>, vector<1x8x128xf32>,
    %c1_i32 = arith.constant 1 : i32
    return
  }
  func.func @transform_0(%arg0: i32, %arg1: i32) -> (i32, i32) {
    %c1_i32 = arith.constant 1 : i32
    %0 = arith.muli %arg0, %c1_i32 : i32
    %1 = arith.addi %0, %arg1 : i32
    %c0_i32 = arith.constant 0 : i32
    %2 = arith.minsi %1, %c0_i32 : i32
    %c0_i32_0 = arith.constant 0 : i32
    %c0_i32_1 = arith.constant 0 : i32
    return %2, %c0_i32_0 : i32, i32
  }
  func.func @transform_1(%arg0: i32, %arg1: i32) -> (i32, i32) {
    %c1_i32 = arith.constant 1 : i32
    %0 = arith.muli %arg0, %c1_i32 : i32
    %1 = arith.addi %0, %arg1 : i32
    %c0_i32 = arith.constant 0 : i32
    %2 = arith.minsi %1, %c0_i32 : i32
    %c0_i32_0 = arith.constant 0 : i32
    %c0_i32_1 = arith.constant 0 : i32
    return %2, %c0_i32_0 : i32, i32
  }
  func.func @transform_2(%arg0: i32, %arg1: i32) -> (i32, i32) {
    %c1_i32 = arith.constant 1 : i32
    %0 = arith.muli %arg0, %c1_i32 : i32
    %1 = arith.addi %0, %arg1 : i32
    %c0_i32 = arith.constant 0 : i32
    %2 = arith.minsi %1, %c0_i32 : i32
    %c0_i32_0 = arith.constant 0 : i32
    %c0_i32_1 = arith.constant 0 : i32
    return %2, %c0_i32_0 : i32, i32
  }
  func.func @transform_3(%arg0: i32, %arg1: i32) -> (i32, i32, i32) {
    %c0_i32 = arith.constant 0 : i32
    %c0_i32_0 = arith.constant 0 : i32
    %c0_i32_1 = arith.constant 0 : i32
    return %arg0, %c0_i32, %c0_i32_0 : i32, i32, i32
  }
}

</mosaic_0001>

<llo_original>
// kernel: tpu_custom_call.1
$region0: #{tpu_custom_call.1}
  #allocation0 [shape = 'u32[]', space=smem, size = 0x4, offset = 0x4, fixed_abs, tag = 'smem constant byte address 0x4 - core index']
  #allocation1 [shape = 'u32[72,128]{1,0:T(1,128)}', space=vmem, size = 0x9000, scoped, tag = 'internal scratch']
  %s0 = inlined_call_operand.hbm [shape: f32[16,128], index: 0, kind: input, shape index: {}]
  %s1 = inlined_call_operand.hbm [shape: f32[16,128], index: 1, kind: input, shape index: {}]
  %s2 = inlined_call_operand.hbm [shape: f32[16,128], index: 2, kind: input, shape index: {}]
  %s3 = inlined_call_operand.hbm [shape: f32[1,8,128], index: 3, kind: output, shape index: {}]
  %s4 = sld [smem:[#allocation0]]
  $region38: #{tpu_custom_call.1} parent=0
    _
  %s6 = ssub.s32 1, %s4
  %s7 = scalar_select 0, %s6, %s4
  $region1: #{tpu_custom_call.1} parent=0
    #allocation2 [shape = 'u8[8192]{0}', space=vmem, size = 0x2000, scoped, tag = 'input window, operand 0, single buffered']
    #allocation3 [shape = 's32[1]{0}', space=sflag, size = 0x4, scoped, tag = 'scoped memory for tpu_custom_call.1']
    #allocation4 [shape = 's32[1]{0}', space=sflag, size = 0x4, scoped, tag = 'scoped memory for tpu_custom_call.1']
    #allocation5 [shape = 'u8[8192]{0}', space=vmem, size = 0x2000, scoped, tag = 'input window, operand 1, single buffered']
    #allocation6 [shape = 's32[1]{0}', space=sflag, size = 0x4, scoped, tag = 'scoped memory for tpu_custom_call.1']
    #allocation7 [shape = 'u8[8192]{0}', space=vmem, size = 0x2000, scoped, tag = 'input window, operand 2, single buffered']
    #allocation8 [shape = 'u8[4096]{0}', space=vmem, size = 0x1000, scoped, tag = 'output window, operand 0, single buffered']
    %8 = vsyncpa [#allocation3], 0
    %9 = vsyncpa [#allocation6], 0
    %10 = vsyncpa [#allocation4], 0
    // Predicated region
    $region2: #{tpu_custom_call.1} parent=1 // pred_check
      _
    $region3: #{tpu_custom_call.1} parent=1 // pred_check_branch
      %12 = sbr.rel (0) target = $region5
    $region4: #{tpu_custom_call.1} parent=1 // pred_region
      %s13 = sadd.s32 0, 0
      %p14 = scmp.lt.s32.totalorder %s13, 0
      %s15 = scalar_select %p14, %s13, 0
      %s16 = smul.u32 2, %s15
      %18 = vsyncadd [#allocation3], 0
      %s19 = smul.addr %s16, 8
      %s20 = scalar_lea.hbm %s0, %s19
      %s21 = sshll.u32 %s20, 4
      %s22 = int_to_ptr.hbm [resolvable:$true] %s21
      %s23 = sshll.u32 [#allocation2], 4
      %s24 = int_to_ptr.vmem [resolvable:$true] %s23
      %29 = dma.hbm_to_vmem [thread:$0]  %s22, 256, %s24, [#allocation3], 128, 128, 8
    $region5: #{tpu_custom_call.1} parent=1 // pred_fallthru
      _
    // Predicated region
    $region6: #{tpu_custom_call.1} parent=1 // pred_check
      _
    $region7: #{tpu_custom_call.1} parent=1 // pred_check_branch
      %31 = sbr.rel (0) target = $region9
    $region8: #{tpu_custom_call.1} parent=1 // pred_region
      %s32 = sadd.s32 0, 0
      %p33 = scmp.lt.s32.totalorder %s32, 0
      %s34 = scalar_select %p33, %s32, 0
      %s35 = smul.u32 2, %s34
      %37 = vsyncadd [#allocation6], 0
      %s38 = smul.addr %s35, 8
      %s39 = scalar_lea.hbm %s1, %s38
      %s40 = sshll.u32 %s39, 4
      %s41 = int_to_ptr.hbm [resolvable:$true] %s40
      %s42 = sshll.u32 [#allocation5], 4
      %s43 = int_to_ptr.vmem [resolvable:$true] %s42
      %48 = dma.hbm_to_vmem [thread:$0]  %s41, 256, %s43, [#allocation6], 128, 128, 8
    $region9: #{tpu_custom_call.1} parent=1 // pred_fallthru
      _
    // Predicated region
    $region10: #{tpu_custom_call.1} parent=1 // pred_check
      _
    $region11: #{tpu_custom_call.1} parent=1 // pred_check_branch
      %50 = sbr.rel (0) target = $region13
    $region12: #{tpu_custom_call.1} parent=1 // pred_region
      %s51 = sadd.s32 0, 0
      %p52 = scmp.lt.s32.totalorder %s51, 0
      %s53 = scalar_select %p52, %s51, 0
      %s54 = smul.u32 2, %s53
      %56 = vsyncadd [#allocation6], 0
      %s57 = smul.addr %s54, 8
      %s58 = scalar_lea.hbm %s2, %s57
      %s59 = sshll.u32 %s58, 4
      %s60 = int_to_ptr.hbm [resolvable:$true] %s59
      %s61 = sshll.u32 [#allocation7], 4
      %s62 = int_to_ptr.vmem [resolvable:$true] %s61
      %67 = dma.hbm_to_vmem [thread:$0]  %s60, 256, %s62, [#allocation6], 128, 128, 8
    $region13: #{tpu_custom_call.1} parent=1 // pred_fallthru
      _
    // Predicated region
    $region14: #{tpu_custom_call.1} parent=1 // pred_check
      _
    $region15: #{tpu_custom_call.1} parent=1 // pred_check_branch
      %69 = sbr.rel (0) target = $region17
    $region16: #{tpu_custom_call.1} parent=1 // pred_region
      %71 = dma.done [#allocation3], 256
    $region17: #{tpu_custom_call.1} parent=1 // pred_fallthru
      _
    // Predicated region
    $region18: #{tpu_custom_call.1} parent=1 // pred_check
      _
    $region19: #{tpu_custom_call.1} parent=1 // pred_check_branch
      %73 = sbr.rel (0) target = $region21
    $region20: #{tpu_custom_call.1} parent=1 // pred_region
      %75 = dma.done [#allocation6], 256
    $region21: #{tpu_custom_call.1} parent=1 // pred_fallthru
      _
    // Predicated region
    $region22: #{tpu_custom_call.1} parent=1 // pred_check
      _
    $region23: #{tpu_custom_call.1} parent=1 // pred_check_branch
      %77 = sbr.rel (0) target = $region25
    $region24: #{tpu_custom_call.1} parent=1 // pred_region
      %79 = dma.done [#allocation6], 256
    $region25: #{tpu_custom_call.1} parent=1 // pred_fallthru
      _
    %s80 = sadd.s32 0, 0
    %p81 = scmp.lt.s32.totalorder %s80, 0
    %s82 = scalar_select %p81, %s80, 0
    %s83 = smul.u32 2, %s82
    %s84 = sadd.s32 0, 0
    %p85 = scmp.lt.s32.totalorder %s84, 0
    %s86 = scalar_select %p85, %s84, 0
    %s87 = smul.u32 2, %s86
    %s88 = sadd.s32 0, 0
    %p89 = scmp.lt.s32.totalorder %s88, 0
    %s90 = scalar_select %p89, %s88, 0
    %s91 = smul.u32 2, %s90
    %p92 = scmp.eq.s32.totalorder 0, 0
    // Predicated region
    $region26: #{tpu_custom_call.1} parent=1 // pred_check
      %p93 = pneg %p92
    $region27: #{tpu_custom_call.1} parent=1 // pred_check_branch
      %95 = sbr.rel (%p93) target = $region29
    $region28: #{tpu_custom_call.1} parent=1 // pred_region
      %96 = vst [vmem:[#allocation8] sm:$0xff] 0.0
    $region29: #{tpu_custom_call.1} parent=1 // pred_fallthru
      _
    %v97 = vld [vmem:[#allocation2] sm:$0xff]
    %v98 = vld [vmem:[#allocation2 + $0x8] sm:$0xff]
    %v99 = vld [vmem:[#allocation5] sm:$0xff]
    %v100 = vld [vmem:[#allocation5 + $0x8] sm:$0xff]
    %v101 = vld [vmem:[#allocation7] sm:$0xff]
    %v102 = vld [vmem:[#allocation7 + $0x8] sm:$0xff]
    %v103 = vsub.f32 %v97, %v99
    %v104 = vsub.f32 %v98, %v100
    %v105 = vand.u32 2147483647, %v103
    %v106 = vand.u32 2147483647, %v104
    %v107 = vmul.f32 %v101, %v105
    %v108 = vmul.f32 %v102, %v106
    %v109 = vld [vmem:[#allocation8] sm:$0xff]
    %v110 = vadd.f32 %v107, %v108
    %v111 = vadd.f32 %v109, %v110
    %112 = vst [vmem:[#allocation8] sm:$0xff] %v111
    // Predicated region
    $region30: #{tpu_custom_call.1} parent=1 // pred_check
      _
    $region31: #{tpu_custom_call.1} parent=1 // pred_check_branch
      %114 = sbr.rel (0) target = $region33
    $region32: #{tpu_custom_call.1} parent=1 // pred_region
      %116 = vsyncadd [#allocation4], 0
      %s118 = sshll.u32 [#allocation8], 4
      %s119 = int_to_ptr.vmem [resolvable:$true] %s118
      %s120 = sshll.u32 %s3, 4
      %s121 = int_to_ptr.hbm [resolvable:$true] %s120
      %123 = dma.vmem_to_hbm [thread:$0]  %s119, 128, %s121, [#allocation4]
    $region33: #{tpu_custom_call.1} parent=1 // pred_fallthru
      _
    // Predicated region
    $region34: #{tpu_custom_call.1} parent=1 // pred_check
      _
    $region35: #{tpu_custom_call.1} parent=1 // pred_check_branch
      %125 = sbr.rel (0) target = $region37
    $region36: #{tpu_custom_call.1} parent=1 // pred_region
      %127 = dma.done [#allocation4], 128
    $region37: #{tpu_custom_call.1} parent=1 // pred_fallthru
      _
    %128 = vsyncpa [#allocation3], 1
    %129 = vsyncpa [#allocation6], 1
    %130 = vsyncpa [#allocation4], 1

</llo_original>
